<compile_context>
chip_gen: v7x
topology: tpu7x:2x2x1
jax: 0.10.0
libtpu: 0.0.40
codegen_flags: <defaults>
</compile_context>

<pallas_src>
import jax
import jax.numpy as jnp
from jax import lax
from jax.experimental import pallas as pl
from jax.experimental.pallas import tpu as pltpu

BN_EPS = 1e-5
# nn.RReLU() defaults: lower=1/8, upper=1/3.  Eval mode uses the mean slope.
RRELU_SLOPE = (1.0 / 8.0 + 1.0 / 3.0) / 2.0


def _round_up(n, m):
    return ((n + m - 1) // m) * m


# ---------------------------------------------------------------------------
# Kernel: fused (Linear+BN-folded) -> leakyReLU -> (Linear+BN-folded) ->
#         leakyReLU -> fused [mu|var] head.  One lane-tight output slab (tb, 2*Dout).
# ---------------------------------------------------------------------------
def _encoder_kernel(x_ref, w0_ref, b0_ref, w1_ref, b1_ref, wh_ref, bh_ref, out_ref):
    # x arrives f32; cast to the matmul operand dtype in-kernel (no wrapper cast op).
    x = x_ref[...].astype(w0_ref.dtype)

    # layer 0 (BN already folded into w0/b0); bias-add + leaky-ReLU in f32.
    h = jnp.dot(x, w0_ref[...], preferred_element_type=jnp.float32)
    h = h + b0_ref[...]
    h = jnp.where(h >= 0.0, h, h * RRELU_SLOPE)

    # layer 1 (BN folded)
    h = jnp.dot(h.astype(w1_ref.dtype), w1_ref[...],
                preferred_element_type=jnp.float32)
    h = h + b1_ref[...]
    h = jnp.where(h >= 0.0, h, h * RRELU_SLOPE)

    # fused heads: columns [:Dout] = mu, [Dout:2*Dout] = var (no lane padding)
    o = jnp.dot(h.astype(wh_ref.dtype), wh_ref[...],
                preferred_element_type=jnp.float32)
    out_ref[...] = (o + bh_ref[...]).astype(out_ref.dtype)


# ---------------------------------------------------------------------------
# Host-side one-time parameter transform: BN fold + head fusion + lane padding
# of the *internal* feature dims only (hidden dims padded to 128 for MXU/lane
# density; the output dim is left at 2*Dout to keep HBM writeback minimal).
# ---------------------------------------------------------------------------
def fold_and_pack_params(p, *, compute_dtype=jnp.bfloat16):
    Din, H0 = p["w0"].shape
    H1 = p["w1"].shape[1]
    Dout = p["wmu"].shape[1]

    # fold eval-mode BatchNorm into the preceding Linear
    s0 = p["gamma0"] * lax.rsqrt(p["rvar0"] + BN_EPS)          # (1, H0)
    w0 = p["w0"] * s0
    b0 = (p["b0"] - p["rmean0"]) * s0 + p["beta0"]

    s1 = p["gamma1"] * lax.rsqrt(p["rvar1"] + BN_EPS)          # (1, H1)
    w1 = p["w1"] * s1
    b1 = (p["b1"] - p["rmean1"]) * s1 + p["beta1"]

    # fuse the two heads into one matmul
    wh = jnp.concatenate([p["wmu"], p["wvar"]], axis=1)        # (H1, 2*Dout)
    bh = jnp.concatenate([p["bmu"], p["bvar"]], axis=1)        # (1, 2*Dout)

    # zero-pad hidden feature dims to 128 lanes (padding does not change results);
    # do NOT pad Din (skinny K is cheap) and do NOT pad the output columns.
    H0p = _round_up(H0, 128)
    H1p = _round_up(H1, 128)
    OUTP = 2 * Dout

    def pad2(a, rows, cols):
        return jnp.pad(a, ((0, rows - a.shape[0]), (0, cols - a.shape[1])))

    packed = {
        "w0": pad2(w0, Din, H0p).astype(compute_dtype),
        "b0": pad2(b0, 1, H0p).astype(jnp.float32),
        "w1": pad2(w1, H0p, H1p).astype(compute_dtype),
        "b1": pad2(b1, 1, H1p).astype(jnp.float32),
        "wh": pad2(wh, H1p, OUTP).astype(compute_dtype),
        "bh": pad2(bh, 1, OUTP).astype(jnp.float32),
    }
    dims = {"Din": Din, "H0p": H0p, "H1p": H1p, "Dout": Dout, "OUTP": OUTP,
            "compute_dtype": compute_dtype}
    return packed, dims


# ---------------------------------------------------------------------------
# Wrapper (designed to be wrapped in jax.jit by the caller)
# ---------------------------------------------------------------------------
def encoder_forward(x, packed, dims, *, batch_tile=None, out_dtype=jnp.float32):
    """x: (B, Din) float32.  Returns (mu, var), each (B, Dout) of out_dtype."""
    B, Din = x.shape
    assert Din == dims["Din"], "input feature dim mismatch"
    Dout, OUTP = dims["Dout"], dims["OUTP"]

    # Batch tile granularity: bf16 packs 16 rows per sublane group, f32 packs 8.
    gran = 16 if dims["compute_dtype"] == jnp.bfloat16 else 8

    if batch_tile is None:
        # Aim for a small, EVEN number of grid steps (>=2 when the batch allows):
        #  - v5e/v6e (1 TC): few steps => little per-step overhead
        #  - v7x (2 TCs):    >=2 "parallel" steps => both cores get work
        if B >= 4 * gran:
            target_steps = 4
        elif B >= 2 * gran:
            target_steps = 2
        else:
            target_steps = 1
        tb = min(1024, _round_up(pl.cdiv(B, target_steps), gran))
    else:
        tb = _round_up(batch_tile, gran)
    Bp = _round_up(B, tb)

    xp = x
    if Bp != B:
        xp = jnp.pad(xp, ((0, Bp - B), (0, 0)))   # rows are independent

    grid = (Bp // tb,)

    def const_spec(shape):
        # weights / biases: one full block, resident across the batch grid
        return pl.BlockSpec(shape, lambda i: (0, 0))

    in_specs = [
        pl.BlockSpec((tb, Din), lambda i: (i, 0)),     # x tile (f32, cast in-kernel)
        const_spec(packed["w0"].shape), const_spec(packed["b0"].shape),
        const_spec(packed["w1"].shape), const_spec(packed["b1"].shape),
        const_spec(packed["wh"].shape), const_spec(packed["bh"].shape),
    ]
    out_specs = pl.BlockSpec((tb, OUTP), lambda i: (i, 0))

    out_itemsize = jnp.dtype(out_dtype).itemsize
    flops = 2 * Bp * (Din * dims["H0p"] + dims["H0p"] * dims["H1p"]
                      + dims["H1p"] * OUTP)
    bytes_accessed = (Bp * Din * 4
                      + sum(int(v.size) * v.dtype.itemsize for v in packed.values())
                      + Bp * OUTP * out_itemsize)

    fn = pl.pallas_call(
        _encoder_kernel,
        out_shape=jax.ShapeDtypeStruct((Bp, OUTP), out_dtype),
        grid_spec=pltpu.PrefetchScalarGridSpec(
            num_scalar_prefetch=0,
            grid=grid,
            in_specs=in_specs,
            out_specs=out_specs,
        ),
        compiler_params=pltpu.CompilerParams(
            dimension_semantics=("parallel",),
            vmem_limit_bytes=32 * 1024 * 1024,
        ),
        cost_estimate=pl.CostEstimate(
            flops=flops, transcendentals=0, bytes_accessed=bytes_accessed),
    )

    out = fn(xp, packed["w0"], packed["b0"], packed["w1"], packed["b1"],
             packed["wh"], packed["bh"])
    mu = out[:B, :Dout]
    var = out[:B, Dout:2 * Dout]
    return mu, var


# ---------------------------------------------------------------------------
# Plain-JAX reference (unfolded params) for validation.
# ---------------------------------------------------------------------------
def encoder_reference(x, p):
    h = x @ p["w0"] + p["b0"]
    h = (h - p["rmean0"]) * lax.rsqrt(p["rvar0"] + BN_EPS) * p["gamma0"] + p["beta0"]
    h = jnp.where(h >= 0, h, h * RRELU_SLOPE)
    h = h @ p["w1"] + p["b1"]
    h = (h - p["rmean1"]) * lax.rsqrt(p["rvar1"] + BN_EPS) * p["gamma1"] + p["beta1"]
    h = jnp.where(h >= 0, h, h * RRELU_SLOPE)
    return h @ p["wmu"] + p["bmu"], h @ p["wvar"] + p["bvar"]


def make_params(key, input_dim_plus1, hidden, output_dim):
    """Deterministic synthetic parameters (PyTorch Linear stores (out,in); here stored transposed (in,out))."""
    ks = jax.random.split(key, 16)
    H0, H1 = hidden
    return {
        "w0": jax.random.normal(ks[0], (input_dim_plus1, H0), jnp.float32) * 0.1,
        "b0": jax.random.normal(ks[1], (1, H0), jnp.float32) * 0.1,
        "gamma0": 1.0 + 0.1 * jax.random.normal(ks[2], (1, H0), jnp.float32),
        "beta0": 0.1 * jax.random.normal(ks[3], (1, H0), jnp.float32),
        "rmean0": 0.1 * jax.random.normal(ks[4], (1, H0), jnp.float32),
        "rvar0": 1.0 + 0.1 * jax.random.uniform(ks[5], (1, H0), jnp.float32),
        "w1": jax.random.normal(ks[6], (H0, H1), jnp.float32) * 0.1,
        "b1": jax.random.normal(ks[7], (1, H1), jnp.float32) * 0.1,
        "gamma1": 1.0 + 0.1 * jax.random.normal(ks[8], (1, H1), jnp.float32),
        "beta1": 0.1 * jax.random.normal(ks[9], (1, H1), jnp.float32),
        "rmean1": 0.1 * jax.random.normal(ks[10], (1, H1), jnp.float32),
        "rvar1": 1.0 + 0.1 * jax.random.uniform(ks[11], (1, H1), jnp.float32),
        "wmu": jax.random.normal(ks[12], (H1, output_dim), jnp.float32) * 0.1,
        "bmu": jax.random.normal(ks[13], (1, output_dim), jnp.float32) * 0.1,
        "wvar": jax.random.normal(ks[14], (H1, output_dim), jnp.float32) * 0.1,
        "bvar": jax.random.normal(ks[15], (1, output_dim), jnp.float32) * 0.1,
    }


if __name__ == "__main__":
    # Module config: params['inputDim']=7 -> inputDim+1=8, hiddenDim=[32,32], outputDim=16.
    input_dim_plus1 = 8
    hidden = (32, 32)
    output_dim = 16

    key = jax.random.PRNGKey(0)
    kx1, kx2, kp = jax.random.split(key, 3)
    params = make_params(kp, input_dim_plus1, hidden, output_dim)

    # --- small batch, f32 operands + f32 output: tight correctness check ------
    x_small = jax.random.normal(kx1, (8, input_dim_plus1), jnp.float32)
    packed_f32, dims_f32 = fold_and_pack_params(params, compute_dtype=jnp.float32)
    fwd_small = jax.jit(lambda x: encoder_forward(x, packed_f32, dims_f32,
                                                  out_dtype=jnp.float32))
    mu, var = jax.block_until_ready(fwd_small(x_small))
    mu_ref, var_ref = encoder_reference(x_small, params)
    assert jnp.allclose(mu, mu_ref, atol=1e-4, rtol=1e-4), "mu mismatch (f32)"
    assert jnp.allclose(var, var_ref, atol=1e-4, rtol=1e-4), "var mismatch (f32)"

    # --- larger batch, bf16 operands, bf16 output, multi-step parallel grid ---
    x_big = jax.random.normal(kx2, (2048, input_dim_plus1), jnp.float32)
    packed_bf16, dims_bf16 = fold_and_pack_params(params, compute_dtype=jnp.bfloat16)
    fwd_big = jax.jit(lambda x: encoder_forward(x, packed_bf16, dims_bf16,
                                                out_dtype=jnp.bfloat16))
    mu_b, var_b = jax.block_until_ready(fwd_big(x_big))
    mu_bref, var_bref = encoder_reference(x_big, params)
    assert jnp.allclose(mu_b.astype(jnp.float32), mu_bref, atol=5e-2, rtol=5e-2), \
        "mu mismatch (bf16)"
    assert jnp.allclose(var_b.astype(jnp.float32), var_bref, atol=5e-2, rtol=5e-2), \
        "var mismatch (bf16)"

    # TODO(synk): training-mode RReLU (random slopes) and batch-stat BatchNorm are
    # stochastic/batch-dependent; eval-mode semantics are implemented here.
    print("KERNEL_OK")
</pallas_src>

<mosaic_0001>
module attributes {stable_mosaic.version = 11 : i64} {
  func.func @_encoder_kernel(%arg0: i32, %arg1: memref<8x8xf32, #tpu.memory_space<vmem>>, %arg2: memref<8x128xf32, #tpu.memory_space<vmem>>, %arg3: memref<1x128xf32, #tpu.memory_space<vmem>>, %arg4: memref<128x128xf32, #tpu.memory_space<vmem>>, %arg5: memref<1x128xf32, #tpu.memory_space<vmem>>, %arg6: memref<128x32xf32, #tpu.memory_space<vmem>>, %arg7: memref<1x32xf32, #tpu.memory_space<vmem>>, %arg8: memref<8x32xf32, #tpu.memory_space<vmem>>) attributes {dimension_semantics = [#tpu.dimension_semantics<parallel>], iteration_bounds = array<i64: 1>, scalar_prefetch = 0 : i64, scratch_operands = 0 : i64, tpu.core_type = #tpu.core_type<tc>, window_params = [{transform_indices = @transform_0, window_bounds = array<i64: 8, 8>}, {pipeline_mode = #tpu.pipeline_mode<synchronous>, transform_indices = @transform_1, window_bounds = array<i64: 8, 128>}, {pipeline_mode = #tpu.pipeline_mode<synchronous>, transform_indices = @transform_2, window_bounds = array<i64: 1, 128>}, {pipeline_mode = #tpu.pipeline_mode<synchronous>, transform_indices = @transform_3, window_bounds = array<i64: 128, 128>}, {pipeline_mode = #tpu.pipeline_mode<synchronous>, transform_indices = @transform_4, window_bounds = array<i64: 1, 128>}, {pipeline_mode = #tpu.pipeline_mode<synchronous>, transform_indices = @transform_5, window_bounds = array<i64: 128, 32>}, {pipeline_mode = #tpu.pipeline_mode<synchronous>, transform_indices = @transform_6, window_bounds = array<i64: 1, 32>}, {transform_indices = @transform_7, window_bounds = array<i64: 8, 32>}]} {
    %c0 = arith.constant 0 : index
    %c0_0 = arith.constant 0 : index
    %0 = vector.load %arg1[%c0, %c0_0] : memref<8x8xf32, #tpu.memory_space<vmem>>, vector<8x8xf32>
    %c0_1 = arith.constant 0 : index
    %c0_2 = arith.constant 0 : index
    %1 = vector.load %arg2[%c0_1, %c0_2] : memref<8x128xf32, #tpu.memory_space<vmem>>, vector<8x128xf32>
    %cst = arith.constant dense<0.000000e+00> : vector<8x128xf32>
    %2 = tpu.matmul %0, %1, %cst {dimension_numbers = #tpu.dot_dimension_numbers<[1], [0], [0], [1], [0, 0, 1, 1], [], []>} : vector<8x8xf32>, vector<8x128xf32>, vector<8x128xf32> -> vector<8x128xf32>
    %c0_3 = arith.constant 0 : index
    %c0_4 = arith.constant 0 : index
    %3 = vector.load %arg3[%c0_3, %c0_4] : memref<1x128xf32, #tpu.memory_space<vmem>>, vector<1x128xf32>
    %4 = vector.broadcast %3 : vector<1x128xf32> to vector<8x128xf32>
    %5 = arith.addf %2, %4 : vector<8x128xf32>
    %cst_5 = arith.constant 0.000000e+00 : f32
    %6 = vector.broadcast %cst_5 : f32 to vector<8x128xf32>
    %7 = arith.cmpf oge, %5, %6 : vector<8x128xf32>
    %cst_6 = arith.constant 0.229166672 : f32
    %8 = vector.broadcast %cst_6 : f32 to vector<8x128xf32>
    %9 = arith.mulf %5, %8 : vector<8x128xf32>
    %10 = arith.select %7, %5, %9 : vector<8x128xi1>, vector<8x128xf32>
    %c0_7 = arith.constant 0 : index
    %c0_8 = arith.constant 0 : index
    %11 = vector.load %arg4[%c0_7, %c0_8] : memref<128x128xf32, #tpu.memory_space<vmem>>, vector<128x128xf32>
    %cst_9 = arith.constant dense<0.000000e+00> : vector<8x128xf32>
    %12 = tpu.matmul %10, %11, %cst_9 {dimension_numbers = #tpu.dot_dimension_numbers<[1], [0], [0], [1], [0, 0, 1, 1], [], []>} : vector<8x128xf32>, vector<128x128xf32>, vector<8x128xf32> -> vector<8x128xf32>
    %c0_10 = arith.constant 0 : index
    %c0_11 = arith.constant 0 : index
    %13 = vector.load %arg5[%c0_10, %c0_11] : memref<1x128xf32, #tpu.memory_space<vmem>>, vector<1x128xf32>
    %14 = vector.broadcast %13 : vector<1x128xf32> to vector<8x128xf32>
    %15 = arith.addf %12, %14 : vector<8x128xf32>
    %cst_12 = arith.constant 0.000000e+00 : f32
    %16 = vector.broadcast %cst_12 : f32 to vector<8x128xf32>
    %17 = arith.cmpf oge, %15, %16 : vector<8x128xf32>
    %cst_13 = arith.constant 0.229166672 : f32
    %18 = vector.broadcast %cst_13 : f32 to vector<8x128xf32>
    %19 = arith.mulf %15, %18 : vector<8x128xf32>
    %20 = arith.select %17, %15, %19 : vector<8x128xi1>, vector<8x128xf32>
    %c0_14 = arith.constant 0 : index
    %c0_15 = arith.constant 0 : index
    %21 = vector.load %arg6[%c0_14, %c0_15] : memref<128x32xf32, #tpu.memory_space<vmem>>, vector<128x32xf32>
    %cst_16 = arith.constant dense<0.000000e+00> : vector<8x32xf32>
    %22 = tpu.matmul %20, %21, %cst_16 {dimension_numbers = #tpu.dot_dimension_numbers<[1], [0], [0], [1], [0, 0, 1, 1], [], []>} : vector<8x128xf32>, vector<128x32xf32>, vector<8x32xf32> -> vector<8x32xf32>
    %c0_17 = arith.constant 0 : index
    %c0_18 = arith.constant 0 : index
    %23 = vector.load %arg7[%c0_17, %c0_18] : memref<1x32xf32, #tpu.memory_space<vmem>>, vector<1x32xf32>
    %24 = vector.broadcast %23 : vector<1x32xf32> to vector<8x32xf32>
    %25 = arith.addf %22, %24 : vector<8x32xf32>
    %c0_19 = arith.constant 0 : index
    %c0_20 = arith.constant 0 : index
    %26 = vector.load %arg8[%c0_19, %c0_20] : memref<8x32xf32, #tpu.memory_space<vmem>>, vector<8x32xf32>
    tpu.vector_store %arg8[%c0_19, %c0_20], %25 {strides = array<i32>} : memref<8x32xf32, #tpu.memory_space<vmem>>, vector<8x32xf32>,
    return
  }
  func.func @transform_0(%arg0: i32) -> (i32, i32) {
    %c0_i32 = arith.constant 0 : i32
    %c0_i32_0 = arith.constant 0 : i32
    return %arg0, %c0_i32 : i32, i32
  }
  func.func @transform_1(%arg0: i32) -> (i32, i32) {
    %c0_i32 = arith.constant 0 : i32
    %c0_i32_0 = arith.constant 0 : i32
    %c0_i32_1 = arith.constant 0 : i32
    return %c0_i32, %c0_i32_0 : i32, i32
  }
  func.func @transform_2(%arg0: i32) -> (i32, i32) {
    %c0_i32 = arith.constant 0 : i32
    %c0_i32_0 = arith.constant 0 : i32
    %c0_i32_1 = arith.constant 0 : i32
    return %c0_i32, %c0_i32_0 : i32, i32
  }
  func.func @transform_3(%arg0: i32) -> (i32, i32) {
    %c0_i32 = arith.constant 0 : i32
    %c0_i32_0 = arith.constant 0 : i32
    %c0_i32_1 = arith.constant 0 : i32
    return %c0_i32, %c0_i32_0 : i32, i32
  }
  func.func @transform_4(%arg0: i32) -> (i32, i32) {
    %c0_i32 = arith.constant 0 : i32
    %c0_i32_0 = arith.constant 0 : i32
    %c0_i32_1 = arith.constant 0 : i32
    return %c0_i32, %c0_i32_0 : i32, i32
  }
  func.func @transform_5(%arg0: i32) -> (i32, i32) {
    %c0_i32 = arith.constant 0 : i32
    %c0_i32_0 = arith.constant 0 : i32
    %c0_i32_1 = arith.constant 0 : i32
    return %c0_i32, %c0_i32_0 : i32, i32
  }
  func.func @transform_6(%arg0: i32) -> (i32, i32) {
    %c0_i32 = arith.constant 0 : i32
    %c0_i32_0 = arith.constant 0 : i32
    %c0_i32_1 = arith.constant 0 : i32
    return %c0_i32, %c0_i32_0 : i32, i32
  }
  func.func @transform_7(%arg0: i32) -> (i32, i32) {
    %c0_i32 = arith.constant 0 : i32
    %c0_i32_0 = arith.constant 0 : i32
    return %arg0, %c0_i32 : i32, i32
  }
}

</mosaic_0001>

<llo_original>
// kernel: _lambda_.1
$region0: #{_lambda_.1}
  #allocation0 [shape = 'u32[]', space=smem, size = 0x4, offset = 0x4, fixed_abs, tag = 'smem constant byte address 0x4 - core index']
  #allocation1 [shape = 'u32[144,128]{1,0:T(1,128)}', space=vmem, size = 0x12000, scoped, tag = 'internal scratch']
  %s0 = inlined_call_operand.hbm [shape: f32[8,8], index: 0, kind: input, shape index: {}]
  %s1 = inlined_call_operand.hbm [shape: f32[8,128], index: 1, kind: input, shape index: {}]
  %s2 = inlined_call_operand.vmem [shape: f32[1,128], index: 2, kind: input, shape index: {}]
  %s3 = inlined_call_operand.hbm [shape: f32[128,128], index: 3, kind: input, shape index: {}]
  %s4 = inlined_call_operand.vmem [shape: f32[1,128], index: 4, kind: input, shape index: {}]
  %s5 = inlined_call_operand.hbm [shape: f32[128,32], index: 5, kind: input, shape index: {}]
  %s6 = inlined_call_operand.vmem [shape: f32[1,32], index: 6, kind: input, shape index: {}]
  %s7 = inlined_call_operand.vmem [shape: f32[8,32], index: 7, kind: output, shape index: {}]
  %s8 = sld [smem:[#allocation0]]
  $region54: #{_lambda_.1} parent=0
    _
  %s10 = ssub.s32 1, %s8
  %s11 = scalar_select 0, %s10, %s8
  $region1: #{_lambda_.1} parent=0
    #allocation2 [shape = 'u8[4096]{0}', space=vmem, size = 0x1000, scoped, tag = 'input window, operand 0, single buffered']
    #allocation3 [shape = 's32[1]{0}', space=sflag, size = 0x4, scoped, tag = 'scoped memory for _lambda_.1']
    #allocation4 [shape = 'u8[4096]{0}', space=vmem, size = 0x1000, scoped, tag = 'input window, operand 1, single buffered']
    #allocation5 [shape = 's32[1]{0}', space=sflag, size = 0x4, scoped, tag = 'scoped memory for _lambda_.1']
    #allocation6 [shape = 'u8[65536]{0}', space=vmem, size = 0x10000, scoped, tag = 'input window, operand 3, single buffered']
    #allocation7 [shape = 'u8[65536]{0}', space=vmem, size = 0x10000, scoped, tag = 'input window, operand 5, single buffered']
    #allocation8 [shape = 's32[1]{0}', space=sflag, size = 0x4, scoped, tag = 'scoped memory for _lambda_.1']
    %12 = vsyncpa [#allocation3], 0
    %13 = vsyncpa [#allocation5], 0
    %14 = vsyncpa [#allocation8], 0
    // Predicated region
    $region2: #{_lambda_.1} parent=1 // pred_check
      _
    $region3: #{_lambda_.1} parent=1 // pred_check_branch
      %16 = sbr.rel (0) target = $region5
    $region4: #{_lambda_.1} parent=1 // pred_region
      %s18 = ssub.s32 128, 128
      %19 = vsyncadd [#allocation3], %s18
      %s21 = sshll.u32 [#allocation2], 4
      %s22 = int_to_ptr.vmem [resolvable:$true] %s21
      %24 = dma.hbm_to_vmem [thread:$0]  %s0, 128, %s22, [#allocation3]
    $region5: #{_lambda_.1} parent=1 // pred_fallthru
      _
    // Predicated region
    $region6: #{_lambda_.1} parent=1 // pred_check
      _
    $region7: #{_lambda_.1} parent=1 // pred_check_branch
      %26 = sbr.rel (0) target = $region9
    $region8: #{_lambda_.1} parent=1 // pred_region
      %s28 = ssub.s32 128, 128
      %29 = vsyncadd [#allocation5], %s28
      %s31 = sshll.u32 [#allocation4], 4
      %s32 = int_to_ptr.vmem [resolvable:$true] %s31
      %34 = dma.hbm_to_vmem [thread:$0]  %s1, 128, %s32, [#allocation5]
    $region9: #{_lambda_.1} parent=1 // pred_fallthru
      _
    // Predicated region
    $region10: #{_lambda_.1} parent=1 // pred_check
      _
    $region11: #{_lambda_.1} parent=1 // pred_check_branch
      %36 = sbr.rel (0) target = $region13
    $region12: #{_lambda_.1} parent=1 // pred_region
      _
    $region13: #{_lambda_.1} parent=1 // pred_fallthru
      _
    // Predicated region
    $region14: #{_lambda_.1} parent=1 // pred_check
      _
    $region15: #{_lambda_.1} parent=1 // pred_check_branch
      %38 = sbr.rel (0) target = $region17
    $region16: #{_lambda_.1} parent=1 // pred_region
      %s40 = ssub.s32 2048, 2048
      %41 = vsyncadd [#allocation5], %s40
      %s42 = sshll.u32 [#allocation6], 4
      %s43 = int_to_ptr.vmem [resolvable:$true] %s42
      %48 = dma.hbm_to_vmem [thread:$0]  %s3, 2048, %s43, [#allocation5], 128, 128, 8
    $region17: #{_lambda_.1} parent=1 // pred_fallthru
      _
    // Predicated region
    $region18: #{_lambda_.1} parent=1 // pred_check
      _
    $region19: #{_lambda_.1} parent=1 // pred_check_branch
      %50 = sbr.rel (0) target = $region21
    $region20: #{_lambda_.1} parent=1 // pred_region
      _
    $region21: #{_lambda_.1} parent=1 // pred_fallthru
      _
    // Predicated region
    $region22: #{_lambda_.1} parent=1 // pred_check
      _
    $region23: #{_lambda_.1} parent=1 // pred_check_branch
      %52 = sbr.rel (0) target = $region25
    $region24: #{_lambda_.1} parent=1 // pred_region
      %s54 = ssub.s32 2048, 2048
      %55 = vsyncadd [#allocation8], %s54
      %s56 = sshll.u32 [#allocation7], 4
      %s57 = int_to_ptr.vmem [resolvable:$true] %s56
      %62 = dma.hbm_to_vmem [thread:$0]  %s5, 2048, %s57, [#allocation8], 128, 128, 8
    $region25: #{_lambda_.1} parent=1 // pred_fallthru
      _
    // Predicated region
    $region26: #{_lambda_.1} parent=1 // pred_check
      _
    $region27: #{_lambda_.1} parent=1 // pred_check_branch
      %64 = sbr.rel (0) target = $region29
    $region28: #{_lambda_.1} parent=1 // pred_region
      _
    $region29: #{_lambda_.1} parent=1 // pred_fallthru
      _
    // Predicated region
    $region30: #{_lambda_.1} parent=1 // pred_check
      _
    $region31: #{_lambda_.1} parent=1 // pred_check_branch
      %66 = sbr.rel (0) target = $region33
    $region32: #{_lambda_.1} parent=1 // pred_region
      %67 = dma.done [#allocation3], 128
    $region33: #{_lambda_.1} parent=1 // pred_fallthru
      _
    // Predicated region
    $region34: #{_lambda_.1} parent=1 // pred_check
      _
    $region35: #{_lambda_.1} parent=1 // pred_check_branch
      %69 = sbr.rel (0) target = $region37
    $region36: #{_lambda_.1} parent=1 // pred_region
      %70 = dma.done [#allocation5], 128
    $region37: #{_lambda_.1} parent=1 // pred_fallthru
      _
    // Predicated region
    $region38: #{_lambda_.1} parent=1 // pred_check
      _
    $region39: #{_lambda_.1} parent=1 // pred_check_branch
      %72 = sbr.rel (0) target = $region41
    $region40: #{_lambda_.1} parent=1 // pred_region
      %73 = dma.done [#allocation5], 2048
    $region41: #{_lambda_.1} parent=1 // pred_fallthru
      _
    // Predicated region
    $region42: #{_lambda_.1} parent=1 // pred_check
      _
    $region43: #{_lambda_.1} parent=1 // pred_check_branch
      %75 = sbr.rel (0) target = $region45
    $region44: #{_lambda_.1} parent=1 // pred_region
      %76 = dma.done [#allocation8], 2048
    $region45: #{_lambda_.1} parent=1 // pred_fallthru
      _
    %v77 = vld [vmem:[#allocation2] sm:$0xff]
    %v78 = vld [vmem:[#allocation4] sm:$0xff]
    %v79 = vld [vmem:[%s2] sm:$0x1]
    %v81 = vlaneseq
    %v82 = vshrl.u32 %v81, 7
    %v83 = vsub.s32 0, %v82
    %v84 = vrot.slane %v79, %v83
    %vm86 = vcmask 64512
    %v88 = vsel %vm86, %v77, 0
    %90 = vmatprep.subr.mxu0 0.0
    %91 = vmatpush1.msra.mxu0 %v78
    %92 = vmatprep.subr.mxu0 0.0
    %93 = vmatpush1.msra.mxu0 0.0
    %94 = vmatprep.subr.mxu0 0.0
    %95 = vmatpush1.msra.mxu0 0.0
    %96 = vmatprep.subr.mxu0 0.0
    %97 = vmatpush1.msra.mxu0 0.0
    %98 = vmatprep.subr.mxu0 0.0
    %99 = vmatpush1.msra.mxu0 0.0
    %100 = vmatprep.subr.mxu0 0.0
    %101 = vmatpush1.msra.mxu0 0.0
    %102 = vmatprep.subr.mxu0 0.0
    %103 = vmatpush1.msra.mxu0 0.0
    %104 = vmatprep.subr.mxu0 0.0
    %105 = vmatpush1.msra.mxu0 0.0
    %106 = vmatprep.subr.mxu0 0.0
    %107 = vmatpush1.msra.mxu0 0.0
    %108 = vmatprep.subr.mxu0 0.0
    %109 = vmatpush1.msra.mxu0 0.0
    %110 = vmatprep.subr.mxu0 0.0
    %111 = vmatpush1.msra.mxu0 0.0
    %112 = vmatprep.subr.mxu0 0.0
    %113 = vmatpush1.msra.mxu0 0.0
    %114 = vmatprep.subr.mxu0 0.0
    %115 = vmatpush1.msra.mxu0 0.0
    %116 = vmatprep.subr.mxu0 0.0
    %117 = vmatpush1.msra.mxu0 0.0
    %118 = vmatprep.subr.mxu0 0.0
    %119 = vmatpush1.msra.mxu0 0.0
    %120 = vmatprep.subr.mxu0 0.0
    %121 = vmatpush1.msra.mxu0 0.0
    %122 = vmatprep.subr.mxu0 0.0
    %123 = vmatpush1.msra.mxu0 0.0
    %124 = vmatprep.subr.mxu0 0.0
    %125 = vmatpush1.msra.mxu0 0.0
    %126 = vmatprep.subr.mxu0 0.0
    %127 = vmatpush1.msra.mxu0 0.0
    %128 = vmatprep.subr.mxu0 0.0
    %129 = vmatpush1.msra.mxu0 0.0
    %130 = vmatprep.subr.mxu0 0.0
    %131 = vmatpush1.msra.mxu0 0.0
    %132 = vmatprep.subr.mxu0 0.0
    %133 = vmatpush1.msra.mxu0 0.0
    %134 = vmatprep.subr.mxu0 0.0
    %135 = vmatpush1.msra.mxu0 0.0
    %136 = vmatprep.subr.mxu0 0.0
    %137 = vmatpush1.msra.mxu0 0.0
    %138 = vmatprep.subr.mxu0 0.0
    %139 = vmatpush1.msra.mxu0 0.0
    %140 = vmatprep.subr.mxu0 0.0
    %141 = vmatpush1.msra.mxu0 0.0
    %142 = vmatprep.subr.mxu0 0.0
    %143 = vmatpush1.msra.mxu0 0.0
    %144 = vmatprep.subr.mxu0 0.0
    %145 = vmatpush1.msra.mxu0 0.0
    %146 = vmatprep.subr.mxu0 0.0
    %147 = vmatpush1.msra.mxu0 0.0
    %148 = vmatprep.subr.mxu0 0.0
    %149 = vmatpush1.msra.mxu0 0.0
    %150 = vmatprep.subr.mxu0 0.0
    %151 = vmatpush1.msra.mxu0 0.0
    %152 = vmatprep.subr.mxu0 0.0
    %153 = vmatpush1.msra.mxu0 0.0
    %154 = vmatprep.mubr.f32.mxu0 0.0
    %155 = vmatmul.mubr.f32.gmra.mrb[0].mxu0 %v88
    %v156 = vpop.f32.mrb[0].mxu0
    %v157 = vadd.f32 %v84, %v156
    %v158 = vpop.f32.mrb[0].mxu0
    %159 = vdwg.mxu0
    %vm160 = vcmp.ge.f32.partialorder %v157, 0.0
    %v161 = vmul.f32 %v157, 0.22916667
    %v162 = vsel %vm160, %v157, %v161
    %v163 = vld [vmem:[#allocation6] sm:$0xff]
    %v164 = vld [vmem:[#allocation6 + $0x8] sm:$0xff]
    %v165 = vld [vmem:[#allocation6 + $0x10] sm:$0xff]
    %v166 = vld [vmem:[#allocation6 + $0x18] sm:$0xff]
    %v167 = vld [vmem:[#allocation6 + $0x20] sm:$0xff]
    %v168 = vld [vmem:[#allocation6 + $0x28] sm:$0xff]
    %v169 = vld [vmem:[#allocation6 + $0x30] sm:$0xff]
    %v170 = vld [vmem:[#allocation6 + $0x38] sm:$0xff]
    %v171 = vld [vmem:[#allocation6 + $0x40] sm:$0xff]
    %v172 = vld [vmem:[#allocation6 + $0x48] sm:$0xff]
    %v173 = vld [vmem:[#allocation6 + $0x50] sm:$0xff]
    %v174 = vld [vmem:[#allocation6 + $0x58] sm:$0xff]
    %v175 = vld [vmem:[#allocation6 + $0x60] sm:$0xff]
    %v176 = vld [vmem:[#allocation6 + $0x68] sm:$0xff]
    %v177 = vld [vmem:[#allocation6 + $0x70] sm:$0xff]
    %v178 = vld [vmem:[#allocation6 + $0x78] sm:$0xff]
    %v179 = vld [vmem:[%s4] sm:$0x1]
    %v181 = vlaneseq
    %v182 = vshrl.u32 %v181, 7
    %v183 = vsub.s32 0, %v182
    %v184 = vrot.slane %v179, %v183
    %186 = vmatprep.subr.mxu0 0.0
    %187 = vmatpush1.msra.mxu0 %v163
    %188 = vmatprep.subr.mxu0 0.0
    %189 = vmatpush1.msra.mxu0 %v164
    %190 = vmatprep.subr.mxu0 0.0
    %191 = vmatpush1.msra.mxu0 %v165
    %192 = vmatprep.subr.mxu0 0.0
    %193 = vmatpush1.msra.mxu0 %v166
    %194 = vmatprep.subr.mxu0 0.0
    %195 = vmatpush1.msra.mxu0 %v167
    %196 = vmatprep.subr.mxu0 0.0
    %197 = vmatpush1.msra.mxu0 %v168
    %198 = vmatprep.subr.mxu0 0.0
    %199 = vmatpush1.msra.mxu0 %v169
    %200 = vmatprep.subr.mxu0 0.0
    %201 = vmatpush1.msra.mxu0 %v170
    %202 = vmatprep.subr.mxu0 0.0
    %203 = vmatpush1.msra.mxu0 %v171
    %204 = vmatprep.subr.mxu0 0.0
    %205 = vmatpush1.msra.mxu0 %v172
    %206 = vmatprep.subr.mxu0 0.0
    %207 = vmatpush1.msra.mxu0 %v173
    %208 = vmatprep.subr.mxu0 0.0
    %209 = vmatpush1.msra.mxu0 %v174
    %210 = vmatprep.subr.mxu0 0.0
    %211 = vmatpush1.msra.mxu0 %v175
    %212 = vmatprep.subr.mxu0 0.0
    %213 = vmatpush1.msra.mxu0 %v176
    %214 = vmatprep.subr.mxu0 0.0
    %215 = vmatpush1.msra.mxu0 %v177
    %216 = vmatprep.subr.mxu0 0.0
    %217 = vmatpush1.msra.mxu0 %v178
    %218 = vmatprep.subr.mxu0 0.0
    %219 = vmatpush1.msra.mxu0 0.0
    %220 = vmatprep.subr.mxu0 0.0
    %221 = vmatpush1.msra.mxu0 0.0
    %222 = vmatprep.subr.mxu0 0.0
    %223 = vmatpush1.msra.mxu0 0.0
    %224 = vmatprep.subr.mxu0 0.0
    %225 = vmatpush1.msra.mxu0 0.0
    %226 = vmatprep.subr.mxu0 0.0
    %227 = vmatpush1.msra.mxu0 0.0
    %228 = vmatprep.subr.mxu0 0.0
    %229 = vmatpush1.msra.mxu0 0.0
    %230 = vmatprep.subr.mxu0 0.0
    %231 = vmatpush1.msra.mxu0 0.0
    %232 = vmatprep.subr.mxu0 0.0
    %233 = vmatpush1.msra.mxu0 0.0
    %234 = vmatprep.subr.mxu0 0.0
    %235 = vmatpush1.msra.mxu0 0.0
    %236 = vmatprep.subr.mxu0 0.0
    %237 = vmatpush1.msra.mxu0 0.0
    %238 = vmatprep.subr.mxu0 0.0
    %239 = vmatpush1.msra.mxu0 0.0
    %240 = vmatprep.subr.mxu0 0.0
    %241 = vmatpush1.msra.mxu0 0.0
    %242 = vmatprep.subr.mxu0 0.0
    %243 = vmatpush1.msra.mxu0 0.0
    %244 = vmatprep.subr.mxu0 0.0
    %245 = vmatpush1.msra.mxu0 0.0
    %246 = vmatprep.subr.mxu0 0.0
    %247 = vmatpush1.msra.mxu0 0.0
    %248 = vmatprep.subr.mxu0 0.0
    %249 = vmatpush1.msra.mxu0 0.0
    %250 = vmatprep.mubr.f32.mxu0 0.0
    %251 = vmatmul.mubr.f32.gmra.mrb[0].mxu0 %v162
    %v252 = vpop.f32.mrb[0].mxu0
    %v253 = vadd.f32 %v184, %v252
    %v254 = vpop.f32.mrb[0].mxu0
    %255 = vdwg.mxu0
    %vm256 = vcmp.ge.f32.partialorder %v253, 0.0
    %v257 = vmul.f32 %v253, 0.22916667
    %v258 = vsel %vm256, %v253, %v257
    %v259 = vld [vmem:[#allocation7] sm:$0xff]
    %v260 = vld [vmem:[#allocation7 + $0x8] sm:$0xff]
    %v261 = vld [vmem:[#allocation7 + $0x10] sm:$0xff]
    %v262 = vld [vmem:[#allocation7 + $0x18] sm:$0xff]
    %v263 = vld [vmem:[#allocation7 + $0x20] sm:$0xff]
    %v264 = vld [vmem:[#allocation7 + $0x28] sm:$0xff]
    %v265 = vld [vmem:[#allocation7 + $0x30] sm:$0xff]
    %v266 = vld [vmem:[#allocation7 + $0x38] sm:$0xff]
    %v267 = vld [vmem:[#allocation7 + $0x40] sm:$0xff]
    %v268 = vld [vmem:[#allocation7 + $0x48] sm:$0xff]
    %v269 = vld [vmem:[#allocation7 + $0x50] sm:$0xff]
    %v270 = vld [vmem:[#allocation7 + $0x58] sm:$0xff]
    %v271 = vld [vmem:[#allocation7 + $0x60] sm:$0xff]
    %v272 = vld [vmem:[#allocation7 + $0x68] sm:$0xff]
    %v273 = vld [vmem:[#allocation7 + $0x70] sm:$0xff]
    %v274 = vld [vmem:[#allocation7 + $0x78] sm:$0xff]
    %v275 = vld [vmem:[%s6] sm:$0x1]
    %v277 = vlaneseq
    %v278 = vshrl.u32 %v277, 7
    %v279 = vsub.s32 0, %v278
    %v280 = vrot.slane %v275, %v279
    %282 = vmatprep.subr.mxu0 0.0
    %283 = vmatpush1.msra.mxu0 %v259
    %284 = vmatprep.subr.mxu0 0.0
    %285 = vmatpush1.msra.mxu0 %v260
    %286 = vmatprep.subr.mxu0 0.0
    %287 = vmatpush1.msra.mxu0 %v261
    %288 = vmatprep.subr.mxu0 0.0
    %289 = vmatpush1.msra.mxu0 %v262
    %290 = vmatprep.subr.mxu0 0.0
    %291 = vmatpush1.msra.mxu0 %v263
    %292 = vmatprep.subr.mxu0 0.0
    %293 = vmatpush1.msra.mxu0 %v264
    %294 = vmatprep.subr.mxu0 0.0
    %295 = vmatpush1.msra.mxu0 %v265
    %296 = vmatprep.subr.mxu0 0.0
    %297 = vmatpush1.msra.mxu0 %v266
    %298 = vmatprep.subr.mxu0 0.0
    %299 = vmatpush1.msra.mxu0 %v267
    %300 = vmatprep.subr.mxu0 0.0
    %301 = vmatpush1.msra.mxu0 %v268
    %302 = vmatprep.subr.mxu0 0.0
    %303 = vmatpush1.msra.mxu0 %v269
    %304 = vmatprep.subr.mxu0 0.0
    %305 = vmatpush1.msra.mxu0 %v270
    %306 = vmatprep.subr.mxu0 0.0
    %307 = vmatpush1.msra.mxu0 %v271
    %308 = vmatprep.subr.mxu0 0.0
    %309 = vmatpush1.msra.mxu0 %v272
    %310 = vmatprep.subr.mxu0 0.0
    %311 = vmatpush1.msra.mxu0 %v273
    %312 = vmatprep.subr.mxu0 0.0
    %313 = vmatpush1.msra.mxu0 %v274
    %314 = vmatprep.subr.mxu0 0.0
    %315 = vmatpush1.msra.mxu0 0.0
    %316 = vmatprep.subr.mxu0 0.0
    %317 = vmatpush1.msra.mxu0 0.0
    %318 = vmatprep.subr.mxu0 0.0
    %319 = vmatpush1.msra.mxu0 0.0
    %320 = vmatprep.subr.mxu0 0.0
    %321 = vmatpush1.msra.mxu0 0.0
    %322 = vmatprep.subr.mxu0 0.0
    %323 = vmatpush1.msra.mxu0 0.0
    %324 = vmatprep.subr.mxu0 0.0
    %325 = vmatpush1.msra.mxu0 0.0
    %326 = vmatprep.subr.mxu0 0.0
    %327 = vmatpush1.msra.mxu0 0.0
    %328 = vmatprep.subr.mxu0 0.0
    %329 = vmatpush1.msra.mxu0 0.0
    %330 = vmatprep.subr.mxu0 0.0
    %331 = vmatpush1.msra.mxu0 0.0
    %332 = vmatprep.subr.mxu0 0.0
    %333 = vmatpush1.msra.mxu0 0.0
    %334 = vmatprep.subr.mxu0 0.0
    %335 = vmatpush1.msra.mxu0 0.0
    %336 = vmatprep.subr.mxu0 0.0
    %337 = vmatpush1.msra.mxu0 0.0
    %338 = vmatprep.subr.mxu0 0.0
    %339 = vmatpush1.msra.mxu0 0.0
    %340 = vmatprep.subr.mxu0 0.0
    %341 = vmatpush1.msra.mxu0 0.0
    %342 = vmatprep.subr.mxu0 0.0
    %343 = vmatpush1.msra.mxu0 0.0
    %344 = vmatprep.subr.mxu0 0.0
    %345 = vmatpush1.msra.mxu0 0.0
    %346 = vmatprep.mubr.f32.mxu0 0.0
    %347 = vmatmul.mubr.f32.gmra.mrb[0].mxu0 %v258
    %v348 = vpop.f32.mrb[0].mxu0
    %v349 = vadd.f32 %v280, %v348
    %v350 = vpop.f32.mrb[0].mxu0
    %351 = vdwg.mxu0
    %vm352 = vcmask 261120
    %353 = vst.msk [vmem:[%s7] sm:$0xff] %vm352, %v349
    // Predicated region
    $region46: #{_lambda_.1} parent=1 // pred_check
      _
    $region47: #{_lambda_.1} parent=1 // pred_check_branch
      %355 = sbr.rel (0) target = $region49
    $region48: #{_lambda_.1} parent=1 // pred_region
      _
    $region49: #{_lambda_.1} parent=1 // pred_fallthru
      _
    // Predicated region
    $region50: #{_lambda_.1} parent=1 // pred_check
      _
    $region51: #{_lambda_.1} parent=1 // pred_check_branch
      %357 = sbr.rel (0) target = $region53
    $region52: #{_lambda_.1} parent=1 // pred_region
      _
    $region53: #{_lambda_.1} parent=1 // pred_fallthru
      _
    %358 = vsyncpa [#allocation3], 1
    %359 = vsyncpa [#allocation5], 1
    %360 = vsyncpa [#allocation8], 1

</llo_original>
